<compile_context>
chip_gen: v7x
topology: tpu7x:2x2x1
jax: 0.10.0
libtpu: 0.0.40
codegen_flags: <defaults>
</compile_context>

<pallas_src>
import functools

import jax
import jax.numpy as jnp
from jax.experimental import pallas as pl
from jax.experimental.pallas import tpu as pltpu


_LANE = 128


def _round_up(v, m):
    return (v + m - 1) // m * m


def _pick_tile(n_pad, preferred):
    """Largest multiple of 128 <= preferred that divides n_pad (n_pad is a 128-multiple)."""
    t = max(_LANE, (min(preferred, n_pad) // _LANE) * _LANE)
    while n_pad % t:
        t -= _LANE
    return t


def _pick_row_tile(n_pad, preferred):
    """Row tile: same as _pick_tile but keep >= 2 row tiles when possible (v7x megacore)."""
    if n_pad >= 2 * _LANE:
        preferred = min(preferred, n_pad // 2)
    return _pick_tile(n_pad, preferred)


# ---------------------------------------------------------------------------
# Pallas kernel: mean aggregation + root/neighbor linear combine (+ optional ReLU)
#   out = inv_deg * (A_counts @ XWl) + XWr + b
# ---------------------------------------------------------------------------
def _sage_layer_kernel(a_ref, xwl_ref, xwr_ref, invdeg_ref, b_ref, o_ref,
                       acc_ref, *, apply_relu):
    # a_ref      : [TM, TK]    bf16 unnormalized adjacency counts tile (rows i, src cols k)
    # xwl_ref    : [TK, Cout]  bf16 precomputed X @ Wl for this k tile
    # xwr_ref    : [TM, Cout]  f32  precomputed X @ Wr for this row tile
    # invdeg_ref : [TM, 1]     f32  1 / degree for this row tile
    # b_ref      : [1,  Cout]  f32  bias (lin_l.bias, padded)
    # acc_ref    : [TM, Cout]  f32  VMEM accumulator for A_counts @ XWl
    k = pl.program_id(1)

    @pl.when(k == 0)
    def _init():
        acc_ref[...] = jnp.zeros_like(acc_ref)

    acc_ref[...] += jnp.dot(a_ref[...], xwl_ref[...],
                            preferred_element_type=jnp.float32)

    @pl.when(k == pl.num_programs(1) - 1)
    def _finalize():
        h = acc_ref[...] * invdeg_ref[...] + xwr_ref[...] + b_ref[...]
        if apply_relu:
            h = jnp.maximum(h, 0.0)
        o_ref[...] = h.astype(o_ref.dtype)


def sage_aggregate_pallas(a_counts, inv_deg, xwl, xwr, b, *, apply_relu,
                          out_dtype, tm=512, tk=2048):
    """out = inv_deg * (A_counts @ XWl) + XWr + b  (+ relu), tiled over (rows, src-cols).

    a_counts: [Np, Np] bf16, inv_deg: [Np, 1] f32, xwl: [Np, Cout] bf16,
    xwr: [Np, Cout] f32, b: [1, Cout] f32.  Returns [Np, Cout] out_dtype.
    """
    npad = a_counts.shape[0]
    cout = xwl.shape[1]
    tm = _pick_row_tile(npad, tm)
    tk = _pick_tile(npad, tk)
    grid = (npad // tm, npad // tk)

    out_bytes = jnp.dtype(out_dtype).itemsize
    # A read once; XWl re-streamed once per row tile; XWr / inv_deg / out read or
    # written once; bias negligible.
    bytes_accessed = (npad * npad * 2
                      + (npad // tm) * npad * cout * 2
                      + npad * cout * 4
                      + npad * 4
                      + cout * 4
                      + npad * cout * out_bytes)
    flops = 2 * npad * npad * cout + 3 * npad * cout

    # Actual VMEM need (double-buffered pipeline bufs + f32 accumulator scratch),
    # capped well below the 64 MiB physical VMEM per TensorCore on v7x.
    vmem_est = (2 * tm * tk * 2          # A tile
                + 2 * tk * cout * 2      # XWl tile
                + 2 * tm * cout * 4      # XWr tile
                + 2 * tm * 4             # inv_deg tile
                + 2 * cout * 4           # bias
                + 2 * tm * cout * out_bytes  # output tile
                + tm * cout * 4)         # accumulator scratch
    vmem_limit = min(48 * 1024 * 1024, max(int(vmem_est * 1.5), 16 * 1024 * 1024))

    kernel = functools.partial(_sage_layer_kernel, apply_relu=apply_relu)
    return pl.pallas_call(
        kernel,
        out_shape=jax.ShapeDtypeStruct((npad, cout), out_dtype),
        grid_spec=pltpu.PrefetchScalarGridSpec(
            num_scalar_prefetch=0,
            grid=grid,
            in_specs=[
                pl.BlockSpec((tm, tk), lambda i, k: (i, k)),       # A counts tile
                pl.BlockSpec((tk, cout), lambda i, k: (k, 0)),     # XWl (source rows)
                pl.BlockSpec((tm, cout), lambda i, k: (i, 0)),     # XWr (root rows)
                pl.BlockSpec((tm, 1), lambda i, k: (i, 0)),        # inv_deg
                pl.BlockSpec((1, cout), lambda i, k: (0, 0)),      # bias (stationary)
            ],
            out_specs=pl.BlockSpec((tm, cout), lambda i, k: (i, 0)),
            scratch_shapes=[pltpu.VMEM((tm, cout), jnp.float32)],
        ),
        compiler_params=pltpu.CompilerParams(
            dimension_semantics=("parallel", "arbitrary"),
            vmem_limit_bytes=vmem_limit,
        ),
        cost_estimate=pl.CostEstimate(
            flops=flops, transcendentals=0, bytes_accessed=bytes_accessed),
    )(a_counts, xwl, xwr, inv_deg, b)


# ---------------------------------------------------------------------------
# Plain-JAX glue (adjacency build, padding, parameter init)
# ---------------------------------------------------------------------------
def build_count_adjacency(edge_index, num_nodes_padded):
    """Unnormalized adjacency counts (bf16, exact for counts <= 256) and f32 1/deg."""
    src = edge_index[0]
    dst = edge_index[1]
    counts = jnp.zeros((num_nodes_padded, num_nodes_padded), jnp.float32)
    counts = counts.at[dst, src].add(1.0)
    deg = counts.sum(axis=1, keepdims=True)
    inv_deg = 1.0 / jnp.where(deg > 0, deg, 1.0)   # isolated/padded nodes -> mean = 0
    return counts.astype(jnp.bfloat16), inv_deg


def init_gnn_params(key, in_channels, hidden_channels, out_channels, num_layers):
    """Deterministic glorot-style init of SAGEConv weights for each layer (f32)."""
    dims = [in_channels] + [hidden_channels] * (num_layers - 1) + [out_channels]
    params = []
    for layer in range(num_layers):
        cin, cout = dims[layer], dims[layer + 1]
        key, k1, k2 = jax.random.split(key, 3)
        scale = (6.0 / (cin + cout)) ** 0.5
        wl = jax.random.uniform(k1, (cin, cout), jnp.float32, -scale, scale)
        wr = jax.random.uniform(k2, (cin, cout), jnp.float32, -scale, scale)
        b = jnp.zeros((1, cout), jnp.float32)
        params.append((wl, wr, b))
    return params


def _pad_params(params):
    """Zero-pad feature dims up to 128 lanes; weights to bf16, bias stays f32."""
    padded = []
    for wl, wr, b in params:
        cin_p = _round_up(wl.shape[0], _LANE)
        cout_p = _round_up(wl.shape[1], _LANE)
        wl_p = jnp.zeros((cin_p, cout_p), jnp.bfloat16)
        wl_p = wl_p.at[: wl.shape[0], : wl.shape[1]].set(wl.astype(jnp.bfloat16))
        wr_p = jnp.zeros((cin_p, cout_p), jnp.bfloat16)
        wr_p = wr_p.at[: wr.shape[0], : wr.shape[1]].set(wr.astype(jnp.bfloat16))
        b_p = jnp.zeros((1, cout_p), jnp.float32).at[:, : b.shape[1]].set(b)
        padded.append((wl_p, wr_p, b_p))
    return padded


def gnn_forward(x, edge_index, params):
    """Full GNN forward (eval mode: dropout is identity)."""
    num_layers = len(params)
    n, c_in = x.shape
    n_pad = _round_up(n, _LANE)

    a_counts, inv_deg = build_count_adjacency(edge_index, n_pad)
    padded_params = _pad_params(params)

    c_in_p = padded_params[0][0].shape[0]
    h = jnp.zeros((n_pad, c_in_p), jnp.float32).at[:n, :c_in].set(x)

    for i, (wl, wr, b) in enumerate(padded_params):
        is_last = i == num_layers - 1
        xb = h.astype(jnp.bfloat16)
        # Small per-node transforms hoisted out of the kernel: X@Wl (bf16 for the MXU
        # aggregation) and X@Wr (kept f32, added at finalize).
        xwl = jnp.dot(xb, wl, preferred_element_type=jnp.float32).astype(jnp.bfloat16)
        xwr = jnp.dot(xb, wr, preferred_element_type=jnp.float32)
        h = sage_aggregate_pallas(
            a_counts, inv_deg, xwl, xwr, b,
            apply_relu=not is_last,
            out_dtype=jnp.float32 if is_last else jnp.bfloat16,
        )

    out_channels = params[-1][0].shape[1]
    return h[:n, :out_channels]


# ---------------------------------------------------------------------------
# References (pure JAX) for sanity checking
# ---------------------------------------------------------------------------
def _ref_counts_f32(edge_index, n):
    src, dst = edge_index[0], edge_index[1]
    counts = jnp.zeros((n, n), jnp.float32).at[dst, src].add(1.0)
    deg = counts.sum(axis=1, keepdims=True)
    inv_deg = 1.0 / jnp.where(deg > 0, deg, 1.0)
    return counts, inv_deg


def gnn_forward_ref(x, edge_index, params):
    """Pure f32 reference."""
    counts, inv_deg = _ref_counts_f32(edge_index, x.shape[0])
    a = counts * inv_deg
    num_layers = len(params)
    h = x
    for i, (wl, wr, b) in enumerate(params):
        h = (a @ h) @ wl + h @ wr + b
        if i != num_layers - 1:
            h = jnp.maximum(h, 0.0)
    return h


def gnn_forward_ref_bf16(x, edge_index, params):
    """Reference emulating the kernel's bf16-input / f32-accumulate pipeline."""
    f32 = jnp.float32
    counts, inv_deg = _ref_counts_f32(edge_index, x.shape[0])
    counts_b = counts.astype(jnp.bfloat16)   # counts <= 256 are exact in bf16
    num_layers = len(params)
    h = x
    for i, (wl, wr, b) in enumerate(params):
        xb = h.astype(jnp.bfloat16)
        wl_b = wl.astype(jnp.bfloat16)
        wr_b = wr.astype(jnp.bfloat16)
        xwl = jnp.dot(xb, wl_b, preferred_element_type=f32).astype(jnp.bfloat16)
        xwr = jnp.dot(xb, wr_b, preferred_element_type=f32)
        agg = jnp.dot(counts_b, xwl, preferred_element_type=f32)
        h = agg * inv_deg + xwr + b
        if i != num_layers - 1:
            h = jnp.maximum(h, 0.0)
            h = h.astype(jnp.bfloat16).astype(f32)   # intermediate layers store bf16
    return h


if __name__ == "__main__":
    key = jax.random.PRNGKey(0)
    k_x, k_e, k_p = jax.random.split(key, 3)

    num_nodes = 16
    in_channels = 8
    hidden_channels = 32
    out_channels = 8
    num_layers = 3
    num_edges = 48

    x = jax.random.normal(k_x, (num_nodes, in_channels), jnp.float32)
    edge_index = jax.random.randint(k_e, (2, num_edges), 0, num_nodes, jnp.int32)

    params = init_gnn_params(
        k_p, in_channels, hidden_channels, out_channels, num_layers
    )

    out = gnn_forward(x, edge_index, params)
    out = jax.block_until_ready(out)
    assert out.shape == (num_nodes, out_channels)

    # Tight check against a reference with matching bf16-input numerics,
    # loose check against the pure f32 reference (bf16 MXU inputs by design).
    ref_bf16 = gnn_forward_ref_bf16(x, edge_index, params)
    ref_f32 = gnn_forward_ref(x, edge_index, params)
    assert jnp.allclose(out, ref_bf16, atol=1e-2, rtol=1e-2), (
        float(jnp.max(jnp.abs(out - ref_bf16))))
    assert jnp.allclose(out, ref_f32, atol=1e-1, rtol=1e-1), (
        float(jnp.max(jnp.abs(out - ref_f32))))

    print("KERNEL_OK")
</pallas_src>

<mosaic_0001>
module attributes {stable_mosaic.version = 11 : i64} {
  func.func @_sage_layer_kernel(%arg0: i32, %arg1: i32, %arg2: memref<128x128xbf16, #tpu.memory_space<vmem>>, %arg3: memref<128x128xbf16, #tpu.memory_space<vmem>>, %arg4: memref<128x128xf32, #tpu.memory_space<vmem>>, %arg5: memref<128x1xf32, #tpu.memory_space<vmem>>, %arg6: memref<1x128xf32, #tpu.memory_space<vmem>>, %arg7: memref<128x128xbf16, #tpu.memory_space<vmem>>, %arg8: memref<128x128xf32, #tpu.memory_space<vmem>>) attributes {dimension_semantics = [#tpu.dimension_semantics<parallel>, #tpu.dimension_semantics<arbitrary>], iteration_bounds = array<i64: 1, 1>, scalar_prefetch = 0 : i64, scratch_operands = 1 : i64, tpu.core_type = #tpu.core_type<tc>, window_params = [{transform_indices = @transform_0, window_bounds = array<i64: 128, 128>}, {transform_indices = @transform_1, window_bounds = array<i64: 128, 128>}, {transform_indices = @transform_2, window_bounds = array<i64: 128, 128>}, {transform_indices = @transform_3, window_bounds = array<i64: 128, 1>}, {pipeline_mode = #tpu.pipeline_mode<synchronous>, transform_indices = @transform_4, window_bounds = array<i64: 1, 128>}, {transform_indices = @transform_5, window_bounds = array<i64: 128, 128>}]} {
    %c0_i32 = arith.constant 0 : i32
    %0 = arith.cmpi eq, %arg1, %c0_i32 : i32
    %1 = arith.extui %0 : i1 to i32
    %c0_i32_0 = arith.constant 0 : i32
    %2 = arith.cmpi ne, %1, %c0_i32_0 : i32
    scf.if %2 {
      %cst_10 = arith.constant 0.000000e+00 : f32
      %12 = vector.broadcast %cst_10 : f32 to vector<128x128xf32>
      %c0_11 = arith.constant 0 : index
      %c0_12 = arith.constant 0 : index
      %13 = vector.load %arg8[%c0_11, %c0_12] : memref<128x128xf32, #tpu.memory_space<vmem>>, vector<128x128xf32>
      tpu.vector_store %arg8[%c0_11, %c0_12], %12 {strides = array<i32>} : memref<128x128xf32, #tpu.memory_space<vmem>>, vector<128x128xf32>,
    } else {
    }
    %c0 = arith.constant 0 : index
    %c0_1 = arith.constant 0 : index
    %3 = vector.load %arg8[%c0, %c0_1] : memref<128x128xf32, #tpu.memory_space<vmem>>, vector<128x128xf32>
    %c0_2 = arith.constant 0 : index
    %c0_3 = arith.constant 0 : index
    %4 = vector.load %arg2[%c0_2, %c0_3] : memref<128x128xbf16, #tpu.memory_space<vmem>>, vector<128x128xbf16>
    %c0_4 = arith.constant 0 : index
    %c0_5 = arith.constant 0 : index
    %5 = vector.load %arg3[%c0_4, %c0_5] : memref<128x128xbf16, #tpu.memory_space<vmem>>, vector<128x128xbf16>
    %cst = arith.constant dense<0.000000e+00> : vector<128x128xf32>
    %6 = tpu.matmul %4, %5, %cst {dimension_numbers = #tpu.dot_dimension_numbers<[1], [0], [0], [1], [0, 0, 1, 1], [], []>} : vector<128x128xbf16>, vector<128x128xbf16>, vector<128x128xf32> -> vector<128x128xf32>
    %7 = arith.addf %3, %6 : vector<128x128xf32>
    %c0_6 = arith.constant 0 : index
    %c0_7 = arith.constant 0 : index
    %8 = vector.load %arg8[%c0_6, %c0_7] : memref<128x128xf32, #tpu.memory_space<vmem>>, vector<128x128xf32>
    tpu.vector_store %arg8[%c0_6, %c0_7], %7 {strides = array<i32>} : memref<128x128xf32, #tpu.memory_space<vmem>>, vector<128x128xf32>,
    %c0_i32_8 = arith.constant 0 : i32
    %9 = arith.cmpi eq, %arg1, %c0_i32_8 : i32
    %10 = arith.extui %9 : i1 to i32
    %c0_i32_9 = arith.constant 0 : i32
    %11 = arith.cmpi ne, %10, %c0_i32_9 : i32
    scf.if %11 {
      %c0_10 = arith.constant 0 : index
      %c0_11 = arith.constant 0 : index
      %12 = vector.load %arg8[%c0_10, %c0_11] : memref<128x128xf32, #tpu.memory_space<vmem>>, vector<128x128xf32>
      %c0_12 = arith.constant 0 : index
      %c0_13 = arith.constant 0 : index
      %13 = vector.load %arg5[%c0_12, %c0_13] : memref<128x1xf32, #tpu.memory_space<vmem>>, vector<128x1xf32>
      %14 = vector.broadcast %13 : vector<128x1xf32> to vector<128x128xf32>
      %15 = arith.mulf %12, %14 : vector<128x128xf32>
      %c0_14 = arith.constant 0 : index
      %c0_15 = arith.constant 0 : index
      %16 = vector.load %arg4[%c0_14, %c0_15] : memref<128x128xf32, #tpu.memory_space<vmem>>, vector<128x128xf32>
      %17 = arith.addf %15, %16 : vector<128x128xf32>
      %c0_16 = arith.constant 0 : index
      %c0_17 = arith.constant 0 : index
      %18 = vector.load %arg6[%c0_16, %c0_17] : memref<1x128xf32, #tpu.memory_space<vmem>>, vector<1x128xf32>
      %19 = vector.broadcast %18 : vector<1x128xf32> to vector<128x128xf32>
      %20 = arith.addf %17, %19 : vector<128x128xf32>
      %cst_18 = arith.constant 0.000000e+00 : f32
      %21 = vector.broadcast %cst_18 : f32 to vector<128x128xf32>
      %22 = arith.maximumf %20, %21 : vector<128x128xf32>
      %23 = arith.truncf %22 : vector<128x128xf32> to vector<128x128xbf16>
      %c0_19 = arith.constant 0 : index
      %c0_20 = arith.constant 0 : index
      %24 = vector.load %arg7[%c0_19, %c0_20] : memref<128x128xbf16, #tpu.memory_space<vmem>>, vector<128x128xbf16>
      tpu.vector_store %arg7[%c0_19, %c0_20], %23 {strides = array<i32>} : memref<128x128xbf16, #tpu.memory_space<vmem>>, vector<128x128xbf16>,
    } else {
    }
    return
  }
  func.func @transform_0(%arg0: i32, %arg1: i32) -> (i32, i32) {
    %c0_i32 = arith.constant 0 : i32
    return %arg0, %arg1 : i32, i32
  }
  func.func @transform_1(%arg0: i32, %arg1: i32) -> (i32, i32) {
    %c0_i32 = arith.constant 0 : i32
    %c0_i32_0 = arith.constant 0 : i32
    return %arg1, %c0_i32 : i32, i32
  }
  func.func @transform_2(%arg0: i32, %arg1: i32) -> (i32, i32) {
    %c0_i32 = arith.constant 0 : i32
    %c0_i32_0 = arith.constant 0 : i32
    return %arg0, %c0_i32 : i32, i32
  }
  func.func @transform_3(%arg0: i32, %arg1: i32) -> (i32, i32) {
    %c0_i32 = arith.constant 0 : i32
    %c0_i32_0 = arith.constant 0 : i32
    return %arg0, %c0_i32 : i32, i32
  }
  func.func @transform_4(%arg0: i32, %arg1: i32) -> (i32, i32) {
    %c0_i32 = arith.constant 0 : i32
    %c0_i32_0 = arith.constant 0 : i32
    %c0_i32_1 = arith.constant 0 : i32
    return %c0_i32, %c0_i32_0 : i32, i32
  }
  func.func @transform_5(%arg0: i32, %arg1: i32) -> (i32, i32) {
    %c0_i32 = arith.constant 0 : i32
    %c0_i32_0 = arith.constant 0 : i32
    return %arg0, %c0_i32 : i32, i32
  }
}

</mosaic_0001>

<llo_original>
// kernel: tpu_custom_call.1
$region0: #{tpu_custom_call.1}
  #allocation0 [shape = 'u32[]', space=smem, size = 0x4, offset = 0x4, fixed_abs, tag = 'smem constant byte address 0x4 - core index']
  #allocation1 [shape = 'u32[144,128]{1,0:T(1,128)}', space=vmem, size = 0x12000, scoped, tag = 'internal scratch']
  #allocation2 [shape = 'f32[128,128]{1,0:T(8,128)}', space=vmem, size = 0x10000, scoped, tag = 'scratch operand']
  %s0 = inlined_call_operand.hbm [shape: bf16[128,128], index: 0, kind: input, shape index: {}]
  %s1 = inlined_call_operand.hbm [shape: bf16[128,128], index: 1, kind: input, shape index: {}]
  %s2 = inlined_call_operand.vmem [shape: f32[128,128], index: 2, kind: input, shape index: {}]
  %s3 = inlined_call_operand.vmem [shape: f32[128,1], index: 3, kind: input, shape index: {}]
  %s4 = inlined_call_operand.vmem [shape: f32[1,128], index: 4, kind: input, shape index: {}]
  %s5 = inlined_call_operand.hbm [shape: bf16[128,128], index: 5, kind: output, shape index: {}]
  %s6 = sld [smem:[#allocation0]]
  $region46: #{tpu_custom_call.1} parent=0
    _
  %s8 = ssub.s32 1, %s6
  %s9 = scalar_select 0, %s8, %s6
  $region1: #{tpu_custom_call.1} parent=0
    #allocation3 [shape = 'u8[32768]{0}', space=vmem, size = 0x8000, scoped, tag = 'input window, operand 0, single buffered']
    #allocation4 [shape = 's32[1]{0}', space=sflag, size = 0x4, scoped, tag = 'scoped memory for tpu_custom_call.1']
    #allocation5 [shape = 's32[1]{0}', space=sflag, size = 0x4, scoped, tag = 'scoped memory for tpu_custom_call.1']
    #allocation6 [shape = 'u8[32768]{0}', space=vmem, size = 0x8000, scoped, tag = 'input window, operand 1, single buffered']
    #allocation7 [shape = 's32[1]{0}', space=sflag, size = 0x4, scoped, tag = 'scoped memory for tpu_custom_call.1']
    #allocation8 [shape = 'u8[32768]{0}', space=vmem, size = 0x8000, scoped, tag = 'output window, operand 0, single buffered']
    %10 = vsyncpa [#allocation4], 0
    %11 = vsyncpa [#allocation7], 0
    %12 = vsyncpa [#allocation5], 0
    // Predicated region
    $region2: #{tpu_custom_call.1} parent=1 // pred_check
      _
    $region3: #{tpu_custom_call.1} parent=1 // pred_check_branch
      %14 = sbr.rel (0) target = $region5
    $region4: #{tpu_custom_call.1} parent=1 // pred_region
      %s16 = ssub.s32 1024, 1024
      %17 = vsyncadd [#allocation4], %s16
      %s18 = sshll.u32 [#allocation3], 4
      %s19 = int_to_ptr.vmem [resolvable:$true] %s18
      %24 = dma.hbm_to_vmem [thread:$0]  %s0, 1024, %s19, [#allocation4], 64, 64, 4
    $region5: #{tpu_custom_call.1} parent=1 // pred_fallthru
      _
    // Predicated region
    $region6: #{tpu_custom_call.1} parent=1 // pred_check
      _
    $region7: #{tpu_custom_call.1} parent=1 // pred_check_branch
      %26 = sbr.rel (0) target = $region9
    $region8: #{tpu_custom_call.1} parent=1 // pred_region
      %s28 = ssub.s32 1024, 1024
      %29 = vsyncadd [#allocation7], %s28
      %s30 = sshll.u32 [#allocation6], 4
      %s31 = int_to_ptr.vmem [resolvable:$true] %s30
      %36 = dma.hbm_to_vmem [thread:$0]  %s1, 1024, %s31, [#allocation7], 64, 64, 4
    $region9: #{tpu_custom_call.1} parent=1 // pred_fallthru
      _
    // Predicated region
    $region10: #{tpu_custom_call.1} parent=1 // pred_check
      _
    $region11: #{tpu_custom_call.1} parent=1 // pred_check_branch
      %38 = sbr.rel (0) target = $region13
    $region12: #{tpu_custom_call.1} parent=1 // pred_region
      _
    $region13: #{tpu_custom_call.1} parent=1 // pred_fallthru
      _
    // Predicated region
    $region14: #{tpu_custom_call.1} parent=1 // pred_check
      _
    $region15: #{tpu_custom_call.1} parent=1 // pred_check_branch
      %40 = sbr.rel (0) target = $region17
    $region16: #{tpu_custom_call.1} parent=1 // pred_region
      _
    $region17: #{tpu_custom_call.1} parent=1 // pred_fallthru
      _
    // Predicated region
    $region18: #{tpu_custom_call.1} parent=1 // pred_check
      _
    $region19: #{tpu_custom_call.1} parent=1 // pred_check_branch
      %42 = sbr.rel (0) target = $region21
    $region20: #{tpu_custom_call.1} parent=1 // pred_region
      _
    $region21: #{tpu_custom_call.1} parent=1 // pred_fallthru
      _
    // Predicated region
    $region22: #{tpu_custom_call.1} parent=1 // pred_check
      _
    $region23: #{tpu_custom_call.1} parent=1 // pred_check_branch
      %44 = sbr.rel (0) target = $region25
    $region24: #{tpu_custom_call.1} parent=1 // pred_region
      %45 = dma.done [#allocation4], 1024
    $region25: #{tpu_custom_call.1} parent=1 // pred_fallthru
      _
    // Predicated region
    $region26: #{tpu_custom_call.1} parent=1 // pred_check
      _
    $region27: #{tpu_custom_call.1} parent=1 // pred_check_branch
      %47 = sbr.rel (0) target = $region29
    $region28: #{tpu_custom_call.1} parent=1 // pred_region
      %48 = dma.done [#allocation7], 1024
    $region29: #{tpu_custom_call.1} parent=1 // pred_fallthru
      _
    %p50 = scmp.eq.s32.totalorder 0, 0
    // Predicated region
    $region30: #{tpu_custom_call.1} parent=1 // pred_check
      %p51 = pneg %p50
    $region31: #{tpu_custom_call.1} parent=1 // pred_check_branch
      %53 = sbr.rel (%p51) target = $region33
    $region32: #{tpu_custom_call.1} parent=1 // pred_region
      %54 = vst [vmem:[#allocation2] sm:$0xff] 0.0
      %55 = vst [vmem:[#allocation2 + $0x8] sm:$0xff] 0.0
      %56 = vst [vmem:[#allocation2 + $0x10] sm:$0xff] 0.0
      %57 = vst [vmem:[#allocation2 + $0x18] sm:$0xff] 0.0
      %58 = vst [vmem:[#allocation2 + $0x20] sm:$0xff] 0.0
      %59 = vst [vmem:[#allocation2 + $0x28] sm:$0xff] 0.0
      %60 = vst [vmem:[#allocation2 + $0x30] sm:$0xff] 0.0
      %61 = vst [vmem:[#allocation2 + $0x38] sm:$0xff] 0.0
      %62 = vst [vmem:[#allocation2 + $0x40] sm:$0xff] 0.0
      %63 = vst [vmem:[#allocation2 + $0x48] sm:$0xff] 0.0
      %64 = vst [vmem:[#allocation2 + $0x50] sm:$0xff] 0.0
      %65 = vst [vmem:[#allocation2 + $0x58] sm:$0xff] 0.0
      %66 = vst [vmem:[#allocation2 + $0x60] sm:$0xff] 0.0
      %67 = vst [vmem:[#allocation2 + $0x68] sm:$0xff] 0.0
      %68 = vst [vmem:[#allocation2 + $0x70] sm:$0xff] 0.0
      %69 = vst [vmem:[#allocation2 + $0x78] sm:$0xff] 0.0
    $region33: #{tpu_custom_call.1} parent=1 // pred_fallthru
      _
    %v70 = vld [vmem:[#allocation2] sm:$0xff]
    %v71 = vld [vmem:[#allocation2 + $0x8] sm:$0xff]
    %v72 = vld [vmem:[#allocation2 + $0x10] sm:$0xff]
    %v73 = vld [vmem:[#allocation2 + $0x18] sm:$0xff]
    %v74 = vld [vmem:[#allocation2 + $0x20] sm:$0xff]
    %v75 = vld [vmem:[#allocation2 + $0x28] sm:$0xff]
    %v76 = vld [vmem:[#allocation2 + $0x30] sm:$0xff]
    %v77 = vld [vmem:[#allocation2 + $0x38] sm:$0xff]
    %v78 = vld [vmem:[#allocation2 + $0x40] sm:$0xff]
    %v79 = vld [vmem:[#allocation2 + $0x48] sm:$0xff]
    %v80 = vld [vmem:[#allocation2 + $0x50] sm:$0xff]
    %v81 = vld [vmem:[#allocation2 + $0x58] sm:$0xff]
    %v82 = vld [vmem:[#allocation2 + $0x60] sm:$0xff]
    %v83 = vld [vmem:[#allocation2 + $0x68] sm:$0xff]
    %v84 = vld [vmem:[#allocation2 + $0x70] sm:$0xff]
    %v85 = vld [vmem:[#allocation2 + $0x78] sm:$0xff]
    %v86 = vld [vmem:[#allocation3] sm:$0xf]
    %v87 = vld [vmem:[#allocation3 + $0x4] sm:$0xf]
    %v88 = vld [vmem:[#allocation3 + $0x8] sm:$0xf]
    %v89 = vld [vmem:[#allocation3 + $0xc] sm:$0xf]
    %v90 = vld [vmem:[#allocation3 + $0x10] sm:$0xf]
    %v91 = vld [vmem:[#allocation3 + $0x14] sm:$0xf]
    %v92 = vld [vmem:[#allocation3 + $0x18] sm:$0xf]
    %v93 = vld [vmem:[#allocation3 + $0x1c] sm:$0xf]
    %v94 = vld [vmem:[#allocation3 + $0x20] sm:$0xf]
    %v95 = vld [vmem:[#allocation3 + $0x24] sm:$0xf]
    %v96 = vld [vmem:[#allocation3 + $0x28] sm:$0xf]
    %v97 = vld [vmem:[#allocation3 + $0x2c] sm:$0xf]
    %v98 = vld [vmem:[#allocation3 + $0x30] sm:$0xf]
    %v99 = vld [vmem:[#allocation3 + $0x34] sm:$0xf]
    %v100 = vld [vmem:[#allocation3 + $0x38] sm:$0xf]
    %v101 = vld [vmem:[#allocation3 + $0x3c] sm:$0xf]
    %v102 = vld [vmem:[#allocation6] sm:$0xf]
    %v103 = vld [vmem:[#allocation6 + $0x4] sm:$0xf]
    %v104 = vld [vmem:[#allocation6 + $0x8] sm:$0xf]
    %v105 = vld [vmem:[#allocation6 + $0xc] sm:$0xf]
    %v106 = vld [vmem:[#allocation6 + $0x10] sm:$0xf]
    %v107 = vld [vmem:[#allocation6 + $0x14] sm:$0xf]
    %v108 = vld [vmem:[#allocation6 + $0x18] sm:$0xf]
    %v109 = vld [vmem:[#allocation6 + $0x1c] sm:$0xf]
    %v110 = vld [vmem:[#allocation6 + $0x20] sm:$0xf]
    %v111 = vld [vmem:[#allocation6 + $0x24] sm:$0xf]
    %v112 = vld [vmem:[#allocation6 + $0x28] sm:$0xf]
    %v113 = vld [vmem:[#allocation6 + $0x2c] sm:$0xf]
    %v114 = vld [vmem:[#allocation6 + $0x30] sm:$0xf]
    %v115 = vld [vmem:[#allocation6 + $0x34] sm:$0xf]
    %v116 = vld [vmem:[#allocation6 + $0x38] sm:$0xf]
    %v117 = vld [vmem:[#allocation6 + $0x3c] sm:$0xf]
    %v134 = vunpack.c.l.b16 %v86
    %v135 = vunpack.c.l.b16 %v87
    %v136 = vunpack.c.l.b16 %v88
    %v137 = vunpack.c.l.b16 %v89
    %v138 = vunpack.c.l.b16 %v90
    %v139 = vunpack.c.l.b16 %v91
    %v140 = vunpack.c.l.b16 %v92
    %v141 = vunpack.c.l.b16 %v93
    %v142 = vunpack.c.l.b16 %v94
    %v143 = vunpack.c.l.b16 %v95
    %v144 = vunpack.c.l.b16 %v96
    %v145 = vunpack.c.l.b16 %v97
    %v146 = vunpack.c.l.b16 %v98
    %v147 = vunpack.c.l.b16 %v99
    %v148 = vunpack.c.l.b16 %v100
    %v149 = vunpack.c.l.b16 %v101
    %v150 = vpack.c.b16 %v135, %v134
    %v151 = vpack.c.b16 %v137, %v136
    %v152 = vpack.c.b16 %v139, %v138
    %v153 = vpack.c.b16 %v141, %v140
    %v154 = vpack.c.b16 %v143, %v142
    %v155 = vpack.c.b16 %v145, %v144
    %v156 = vpack.c.b16 %v147, %v146
    %v157 = vpack.c.b16 %v149, %v148
    %v182 = vunpack.c.l.b16 %v102
    %v183 = vunpack.c.l.b16 %v103
    %v184 = vunpack.c.l.b16 %v104
    %v185 = vunpack.c.l.b16 %v105
    %v186 = vunpack.c.l.b16 %v106
    %v187 = vunpack.c.l.b16 %v107
    %v188 = vunpack.c.l.b16 %v108
    %v189 = vunpack.c.l.b16 %v109
    %v190 = vunpack.c.l.b16 %v110
    %v191 = vunpack.c.l.b16 %v111
    %v192 = vunpack.c.l.b16 %v112
    %v193 = vunpack.c.l.b16 %v113
    %v194 = vunpack.c.l.b16 %v114
    %v195 = vunpack.c.l.b16 %v115
    %v196 = vunpack.c.l.b16 %v116
    %v197 = vunpack.c.l.b16 %v117
    %v198 = vpack.c.b16 %v183, %v182
    %v199 = vpack.c.b16 %v185, %v184
    %v200 = vpack.c.b16 %v187, %v186
    %v201 = vpack.c.b16 %v189, %v188
    %v202 = vpack.c.b16 %v191, %v190
    %v203 = vpack.c.b16 %v193, %v192
    %v204 = vpack.c.b16 %v195, %v194
    %v205 = vpack.c.b16 %v197, %v196
    %214 = vmatprep.subr.bf16.mxu0 0
    %215 = vmatpush1.bf16.msra.mxu0 %v198
    %216 = vmatprep.subr.bf16.mxu0 0
    %217 = vmatpush1.bf16.msra.mxu0 %v199
    %218 = vmatprep.subr.bf16.mxu0 0
    %219 = vmatpush1.bf16.msra.mxu0 %v200
    %220 = vmatprep.subr.bf16.mxu0 0
    %221 = vmatpush1.bf16.msra.mxu0 %v201
    %222 = vmatprep.subr.bf16.mxu0 0
    %223 = vmatpush1.bf16.msra.mxu0 %v202
    %224 = vmatprep.subr.bf16.mxu0 0
    %225 = vmatpush1.bf16.msra.mxu0 %v203
    %226 = vmatprep.subr.bf16.mxu0 0
    %227 = vmatpush1.bf16.msra.mxu0 %v204
    %228 = vmatprep.subr.bf16.mxu0 0
    %229 = vmatpush1.bf16.msra.mxu0 %v205
    %230 = vmatprep.subr.bf16.mxu0 0
    %231 = vmatpush1.bf16.msra.mxu0 0
    %232 = vmatprep.subr.bf16.mxu0 0
    %233 = vmatpush1.bf16.msra.mxu0 0
    %234 = vmatprep.subr.bf16.mxu0 0
    %235 = vmatpush1.bf16.msra.mxu0 0
    %236 = vmatprep.subr.bf16.mxu0 0
    %237 = vmatpush1.bf16.msra.mxu0 0
    %238 = vmatprep.subr.bf16.mxu0 0
    %239 = vmatpush1.bf16.msra.mxu0 0
    %240 = vmatprep.subr.bf16.mxu0 0
    %241 = vmatpush1.bf16.msra.mxu0 0
    %242 = vmatprep.subr.bf16.mxu0 0
    %243 = vmatpush1.bf16.msra.mxu0 0
    %244 = vmatprep.subr.bf16.mxu0 0
    %245 = vmatpush1.bf16.msra.mxu0 0
    %246 = vmatprep.mubr.bf16.mxu0 0
    %247 = vmatmul.mubr.bf16.gmra.mrb[0].mxu0 %v150
    %v248 = vpop.f32.mrb[0].mxu0
    %v249 = vadd.f32 0.0, %v248
    %v250 = vpop.f32.mrb[0].mxu0
    %v251 = vpop.f32.mrb[0].mxu0
    %v252 = vadd.f32 0.0, %v251
    %v253 = vpop.f32.mrb[0].mxu0
    %254 = vmatprep.mubr.bf16.mxu0 0
    %255 = vmatmul.mubr.bf16.gmra.mrb[0].mxu0 %v151
    %v256 = vpop.f32.mrb[0].mxu0
    %v257 = vadd.f32 0.0, %v256
    %v258 = vpop.f32.mrb[0].mxu0
    %v259 = vpop.f32.mrb[0].mxu0
    %v260 = vadd.f32 0.0, %v259
    %v261 = vpop.f32.mrb[0].mxu0
    %262 = vmatprep.mubr.bf16.mxu0 0
    %263 = vmatmul.mubr.bf16.gmra.mrb[0].mxu0 %v152
    %v264 = vpop.f32.mrb[0].mxu0
    %v265 = vadd.f32 0.0, %v264
    %v266 = vpop.f32.mrb[0].mxu0
    %v267 = vpop.f32.mrb[0].mxu0
    %v268 = vadd.f32 0.0, %v267
    %v269 = vpop.f32.mrb[0].mxu0
    %270 = vmatprep.mubr.bf16.mxu0 0
    %271 = vmatmul.mubr.bf16.gmra.mrb[0].mxu0 %v153
    %v272 = vpop.f32.mrb[0].mxu0
    %v273 = vadd.f32 0.0, %v272
    %v274 = vpop.f32.mrb[0].mxu0
    %v275 = vpop.f32.mrb[0].mxu0
    %v276 = vadd.f32 0.0, %v275
    %v277 = vpop.f32.mrb[0].mxu0
    %278 = vmatprep.mubr.bf16.mxu0 0
    %279 = vmatmul.mubr.bf16.gmra.mrb[0].mxu0 %v154
    %v280 = vpop.f32.mrb[0].mxu0
    %v281 = vadd.f32 0.0, %v280
    %v282 = vpop.f32.mrb[0].mxu0
    %v283 = vpop.f32.mrb[0].mxu0
    %v284 = vadd.f32 0.0, %v283
    %v285 = vpop.f32.mrb[0].mxu0
    %286 = vmatprep.mubr.bf16.mxu0 0
    %287 = vmatmul.mubr.bf16.gmra.mrb[0].mxu0 %v155
    %v288 = vpop.f32.mrb[0].mxu0
    %v289 = vadd.f32 0.0, %v288
    %v290 = vpop.f32.mrb[0].mxu0
    %v291 = vpop.f32.mrb[0].mxu0
    %v292 = vadd.f32 0.0, %v291
    %v293 = vpop.f32.mrb[0].mxu0
    %294 = vmatprep.mubr.bf16.mxu0 0
    %295 = vmatmul.mubr.bf16.gmra.mrb[0].mxu0 %v156
    %v296 = vpop.f32.mrb[0].mxu0
    %v297 = vadd.f32 0.0, %v296
    %v298 = vpop.f32.mrb[0].mxu0
    %v299 = vpop.f32.mrb[0].mxu0
    %v300 = vadd.f32 0.0, %v299
    %v301 = vpop.f32.mrb[0].mxu0
    %302 = vmatprep.mubr.bf16.mxu0 0
    %303 = vmatmul.mubr.bf16.gmra.mrb[0].mxu0 %v157
    %v304 = vpop.f32.mrb[0].mxu0
    %v305 = vadd.f32 0.0, %v304
    %v306 = vpop.f32.mrb[0].mxu0
    %v307 = vpop.f32.mrb[0].mxu0
    %v308 = vadd.f32 0.0, %v307
    %v309 = vpop.f32.mrb[0].mxu0
    %310 = vdwg.mxu0
    %v311 = vadd.f32 %v70, %v249
    %v312 = vadd.f32 %v71, %v252
    %v313 = vadd.f32 %v72, %v257
    %v314 = vadd.f32 %v73, %v260
    %v315 = vadd.f32 %v74, %v265
    %v316 = vadd.f32 %v75, %v268
    %v317 = vadd.f32 %v76, %v273
    %v318 = vadd.f32 %v77, %v276
    %v319 = vadd.f32 %v78, %v281
    %v320 = vadd.f32 %v79, %v284
    %v321 = vadd.f32 %v80, %v289
    %v322 = vadd.f32 %v81, %v292
    %v323 = vadd.f32 %v82, %v297
    %v324 = vadd.f32 %v83, %v300
    %v325 = vadd.f32 %v84, %v305
    %v326 = vadd.f32 %v85, %v308
    %327 = vst [vmem:[#allocation2] sm:$0xff] %v311
    %328 = vst [vmem:[#allocation2 + $0x8] sm:$0xff] %v312
    %329 = vst [vmem:[#allocation2 + $0x10] sm:$0xff] %v313
    %330 = vst [vmem:[#allocation2 + $0x18] sm:$0xff] %v314
    %331 = vst [vmem:[#allocation2 + $0x20] sm:$0xff] %v315
    %332 = vst [vmem:[#allocation2 + $0x28] sm:$0xff] %v316
    %333 = vst [vmem:[#allocation2 + $0x30] sm:$0xff] %v317
    %334 = vst [vmem:[#allocation2 + $0x38] sm:$0xff] %v318
    %335 = vst [vmem:[#allocation2 + $0x40] sm:$0xff] %v319
    %336 = vst [vmem:[#allocation2 + $0x48] sm:$0xff] %v320
    %337 = vst [vmem:[#allocation2 + $0x50] sm:$0xff] %v321
    %338 = vst [vmem:[#allocation2 + $0x58] sm:$0xff] %v322
    %339 = vst [vmem:[#allocation2 + $0x60] sm:$0xff] %v323
    %340 = vst [vmem:[#allocation2 + $0x68] sm:$0xff] %v324
    %341 = vst [vmem:[#allocation2 + $0x70] sm:$0xff] %v325
    %342 = vst [vmem:[#allocation2 + $0x78] sm:$0xff] %v326
    // Predicated region
    $region34: #{tpu_custom_call.1} parent=1 // pred_check
      %p343 = pneg %p50
    $region35: #{tpu_custom_call.1} parent=1 // pred_check_branch
      %345 = sbr.rel (%p343) target = $region37
    $region36: #{tpu_custom_call.1} parent=1 // pred_region
      %v346 = vld [vmem:[#allocation2] sm:$0xff]
      %v347 = vld [vmem:[#allocation2 + $0x8] sm:$0xff]
      %v348 = vld [vmem:[#allocation2 + $0x10] sm:$0xff]
      %v349 = vld [vmem:[#allocation2 + $0x18] sm:$0xff]
      %v350 = vld [vmem:[#allocation2 + $0x20] sm:$0xff]
      %v351 = vld [vmem:[#allocation2 + $0x28] sm:$0xff]
      %v352 = vld [vmem:[#allocation2 + $0x30] sm:$0xff]
      %v353 = vld [vmem:[#allocation2 + $0x38] sm:$0xff]
      %v354 = vld [vmem:[#allocation2 + $0x40] sm:$0xff]
      %v355 = vld [vmem:[#allocation2 + $0x48] sm:$0xff]
      %v356 = vld [vmem:[#allocation2 + $0x50] sm:$0xff]
      %v357 = vld [vmem:[#allocation2 + $0x58] sm:$0xff]
      %v358 = vld [vmem:[#allocation2 + $0x60] sm:$0xff]
      %v359 = vld [vmem:[#allocation2 + $0x68] sm:$0xff]
      %v360 = vld [vmem:[#allocation2 + $0x70] sm:$0xff]
      %v361 = vld [vmem:[#allocation2 + $0x78] sm:$0xff]
      %v362 = vld [vmem:[%s3] sm:$0xff]
      %v363 = vld [vmem:[%s3 + $0x8] sm:$0xff]
      %v364 = vld [vmem:[%s3 + $0x10] sm:$0xff]
      %v365 = vld [vmem:[%s3 + $0x18] sm:$0xff]
      %v366 = vld [vmem:[%s3 + $0x20] sm:$0xff]
      %v367 = vld [vmem:[%s3 + $0x28] sm:$0xff]
      %v368 = vld [vmem:[%s3 + $0x30] sm:$0xff]
      %v369 = vld [vmem:[%s3 + $0x38] sm:$0xff]
      %v370 = vld [vmem:[%s3 + $0x40] sm:$0xff]
      %v371 = vld [vmem:[%s3 + $0x48] sm:$0xff]
      %v372 = vld [vmem:[%s3 + $0x50] sm:$0xff]
      %v373 = vld [vmem:[%s3 + $0x58] sm:$0xff]
      %v374 = vld [vmem:[%s3 + $0x60] sm:$0xff]
      %v375 = vld [vmem:[%s3 + $0x68] sm:$0xff]
      %v376 = vld [vmem:[%s3 + $0x70] sm:$0xff]
      %v377 = vld [vmem:[%s3 + $0x78] sm:$0xff]
      %379 = vset.pattern.permute.xlu0 0
      %380 = vperm.xlu0 %379, %v362
      %v381 = vpop.permute.xlu0 %380
      %384 = vset.pattern.permute.xlu0 0
      %385 = vperm.xlu0 %384, %v363
      %v386 = vpop.permute.xlu0 %385
      %389 = vset.pattern.permute.xlu0 0
      %390 = vperm.xlu0 %389, %v364
      %v391 = vpop.permute.xlu0 %390
      %394 = vset.pattern.permute.xlu0 0
      %395 = vperm.xlu0 %394, %v365
      %v396 = vpop.permute.xlu0 %395
      %399 = vset.pattern.permute.xlu0 0
      %400 = vperm.xlu0 %399, %v366
      %v401 = vpop.permute.xlu0 %400
      %404 = vset.pattern.permute.xlu0 0
      %405 = vperm.xlu0 %404, %v367
      %v406 = vpop.permute.xlu0 %405
      %409 = vset.pattern.permute.xlu0 0
      %410 = vperm.xlu0 %409, %v368
      %v411 = vpop.permute.xlu0 %410
      %414 = vset.pattern.permute.xlu0 0
      %415 = vperm.xlu0 %414, %v369
      %v416 = vpop.permute.xlu0 %415
      %419 = vset.pattern.permute.xlu0 0
      %420 = vperm.xlu0 %419, %v370
      %v421 = vpop.permute.xlu0 %420
      %424 = vset.pattern.permute.xlu0 0
      %425 = vperm.xlu0 %424, %v371
      %v426 = vpop.permute.xlu0 %425
      %429 = vset.pattern.permute.xlu0 0
      %430 = vperm.xlu0 %429, %v372
      %v431 = vpop.permute.xlu0 %430
      %434 = vset.pattern.permute.xlu0 0
      %435 = vperm.xlu0 %434, %v373
      %v436 = vpop.permute.xlu0 %435
      %439 = vset.pattern.permute.xlu0 0
      %440 = vperm.xlu0 %439, %v374
      %v441 = vpop.permute.xlu0 %440
      %444 = vset.pattern.permute.xlu0 0
      %445 = vperm.xlu0 %444, %v375
      %v446 = vpop.permute.xlu0 %445
      %449 = vset.pattern.permute.xlu0 0
      %450 = vperm.xlu0 %449, %v376
      %v451 = vpop.permute.xlu0 %450
      %454 = vset.pattern.permute.xlu0 0
      %455 = vperm.xlu0 %454, %v377
      %v456 = vpop.permute.xlu0 %455
      %v458 = vmul.f32 %v346, %v381
      %v459 = vmul.f32 %v347, %v386
      %v460 = vmul.f32 %v348, %v391
      %v461 = vmul.f32 %v349, %v396
      %v462 = vmul.f32 %v350, %v401
      %v463 = vmul.f32 %v351, %v406
      %v464 = vmul.f32 %v352, %v411
      %v465 = vmul.f32 %v353, %v416
      %v466 = vmul.f32 %v354, %v421
      %v467 = vmul.f32 %v355, %v426
      %v468 = vmul.f32 %v356, %v431
      %v469 = vmul.f32 %v357, %v436
      %v470 = vmul.f32 %v358, %v441
      %v471 = vmul.f32 %v359, %v446
      %v472 = vmul.f32 %v360, %v451
      %v473 = vmul.f32 %v361, %v456
      %v474 = vld [vmem:[%s2] sm:$0xff]
      %v475 = vld [vmem:[%s2 + $0x8] sm:$0xff]
      %v476 = vld [vmem:[%s2 + $0x10] sm:$0xff]
      %v477 = vld [vmem:[%s2 + $0x18] sm:$0xff]
      %v478 = vld [vmem:[%s2 + $0x20] sm:$0xff]
      %v479 = vld [vmem:[%s2 + $0x28] sm:$0xff]
      %v480 = vld [vmem:[%s2 + $0x30] sm:$0xff]
      %v481 = vld [vmem:[%s2 + $0x38] sm:$0xff]
      %v482 = vld [vmem:[%s2 + $0x40] sm:$0xff]
      %v483 = vld [vmem:[%s2 + $0x48] sm:$0xff]
      %v484 = vld [vmem:[%s2 + $0x50] sm:$0xff]
      %v485 = vld [vmem:[%s2 + $0x58] sm:$0xff]
      %v486 = vld [vmem:[%s2 + $0x60] sm:$0xff]
      %v487 = vld [vmem:[%s2 + $0x68] sm:$0xff]
      %v488 = vld [vmem:[%s2 + $0x70] sm:$0xff]
      %v489 = vld [vmem:[%s2 + $0x78] sm:$0xff]
      %v490 = vadd.f32 %v458, %v474
      %v491 = vadd.f32 %v459, %v475
      %v492 = vadd.f32 %v460, %v476
      %v493 = vadd.f32 %v461, %v477
      %v494 = vadd.f32 %v462, %v478
      %v495 = vadd.f32 %v463, %v479
      %v496 = vadd.f32 %v464, %v480
      %v497 = vadd.f32 %v465, %v481
      %v498 = vadd.f32 %v466, %v482
      %v499 = vadd.f32 %v467, %v483
      %v500 = vadd.f32 %v468, %v484
      %v501 = vadd.f32 %v469, %v485
      %v502 = vadd.f32 %v470, %v486
      %v503 = vadd.f32 %v471, %v487
      %v504 = vadd.f32 %v472, %v488
      %v505 = vadd.f32 %v473, %v489
      %v506 = vld [vmem:[%s4] sm:$0x1]
      %v508 = vlaneseq
      %v509 = vshrl.u32 %v508, 7
      %v510 = vsub.s32 0, %v509
      %v511 = vrot.slane %v506, %v510
      %v513 = vadd.f32 %v490, %v511
      %v514 = vadd.f32 %v491, %v511
      %v515 = vadd.f32 %v492, %v511
      %v516 = vadd.f32 %v493, %v511
      %v517 = vadd.f32 %v494, %v511
      %v518 = vadd.f32 %v495, %v511
      %v519 = vadd.f32 %v496, %v511
      %v520 = vadd.f32 %v497, %v511
      %v521 = vadd.f32 %v498, %v511
      %v522 = vadd.f32 %v499, %v511
      %v523 = vadd.f32 %v500, %v511
      %v524 = vadd.f32 %v501, %v511
      %v525 = vadd.f32 %v502, %v511
      %v526 = vadd.f32 %v503, %v511
      %v527 = vadd.f32 %v504, %v511
      %v528 = vadd.f32 %v505, %v511
      %v529 = vmax.f32 %v513, 0.0
      %v530 = vmax.f32 %v514, 0.0
      %v531 = vmax.f32 %v515, 0.0
      %v532 = vmax.f32 %v516, 0.0
      %v533 = vmax.f32 %v517, 0.0
      %v534 = vmax.f32 %v518, 0.0
      %v535 = vmax.f32 %v519, 0.0
      %v536 = vmax.f32 %v520, 0.0
      %v537 = vmax.f32 %v521, 0.0
      %v538 = vmax.f32 %v522, 0.0
      %v539 = vmax.f32 %v523, 0.0
      %v540 = vmax.f32 %v524, 0.0
      %v541 = vmax.f32 %v525, 0.0
      %v542 = vmax.f32 %v526, 0.0
      %v543 = vmax.f32 %v527, 0.0
      %v544 = vmax.f32 %v528, 0.0
      %v545 = vpack.c.bf16 %v530, %v529
      %v546 = vpack.c.bf16 %v532, %v531
      %v547 = vpack.c.bf16 %v534, %v533
      %v548 = vpack.c.bf16 %v536, %v535
      %v549 = vpack.c.bf16 %v538, %v537
      %v550 = vpack.c.bf16 %v540, %v539
      %v551 = vpack.c.bf16 %v542, %v541
      %v552 = vpack.c.bf16 %v544, %v543
      %v561 = vunpack.c.l.b16 %v545
      %v562 = vunpack.c.h.b16 %v545
      %v563 = vunpack.c.l.b16 %v546
      %v564 = vunpack.c.h.b16 %v546
      %v565 = vunpack.c.l.b16 %v547
      %v566 = vunpack.c.h.b16 %v547
      %v567 = vunpack.c.l.b16 %v548
      %v568 = vunpack.c.h.b16 %v548
      %v569 = vunpack.c.l.b16 %v549
      %v570 = vunpack.c.h.b16 %v549
      %v571 = vunpack.c.l.b16 %v550
      %v572 = vunpack.c.h.b16 %v550
      %v573 = vunpack.c.l.b16 %v551
      %v574 = vunpack.c.h.b16 %v551
      %v575 = vunpack.c.l.b16 %v552
      %v576 = vunpack.c.h.b16 %v552
      %v577 = vpack.c.b16 %v561, %v561
      %v578 = vpack.c.b16 %v562, %v562
      %v579 = vpack.c.b16 %v563, %v563
      %v580 = vpack.c.b16 %v564, %v564
      %v581 = vpack.c.b16 %v565, %v565
      %v582 = vpack.c.b16 %v566, %v566
      %v583 = vpack.c.b16 %v567, %v567
      %v584 = vpack.c.b16 %v568, %v568
      %v585 = vpack.c.b16 %v569, %v569
      %v586 = vpack.c.b16 %v570, %v570
      %v587 = vpack.c.b16 %v571, %v571
      %v588 = vpack.c.b16 %v572, %v572
      %v589 = vpack.c.b16 %v573, %v573
      %v590 = vpack.c.b16 %v574, %v574
      %v591 = vpack.c.b16 %v575, %v575
      %v592 = vpack.c.b16 %v576, %v576
      %609 = vst [vmem:[#allocation8] sm:$0xf] %v577
      %610 = vst [vmem:[#allocation8 + $0x4] sm:$0xf] %v578
      %611 = vst [vmem:[#allocation8 + $0x8] sm:$0xf] %v579
      %612 = vst [vmem:[#allocation8 + $0xc] sm:$0xf] %v580
      %613 = vst [vmem:[#allocation8 + $0x10] sm:$0xf] %v581
      %614 = vst [vmem:[#allocation8 + $0x14] sm:$0xf] %v582
      %615 = vst [vmem:[#allocation8 + $0x18] sm:$0xf] %v583
      %616 = vst [vmem:[#allocation8 + $0x1c] sm:$0xf] %v584
      %617 = vst [vmem:[#allocation8 + $0x20] sm:$0xf] %v585
      %618 = vst [vmem:[#allocation8 + $0x24] sm:$0xf] %v586
      %619 = vst [vmem:[#allocation8 + $0x28] sm:$0xf] %v587
      %620 = vst [vmem:[#allocation8 + $0x2c] sm:$0xf] %v588
      %621 = vst [vmem:[#allocation8 + $0x30] sm:$0xf] %v589
      %622 = vst [vmem:[#allocation8 + $0x34] sm:$0xf] %v590
      %623 = vst [vmem:[#allocation8 + $0x38] sm:$0xf] %v591
      %624 = vst [vmem:[#allocation8 + $0x3c] sm:$0xf] %v592
    $region37: #{tpu_custom_call.1} parent=1 // pred_fallthru
      _
    // Predicated region
    $region38: #{tpu_custom_call.1} parent=1 // pred_check
      _
    $region39: #{tpu_custom_call.1} parent=1 // pred_check_branch
      %626 = sbr.rel (0) target = $region41
    $region40: #{tpu_custom_call.1} parent=1 // pred_region
      %s628 = ssub.s32 1024, 1024
      %629 = vsyncadd [#allocation5], %s628
      %s630 = sshll.u32 [#allocation8], 4
      %s631 = int_to_ptr.vmem [resolvable:$true] %s630
      %636 = dma.vmem_to_hbm [thread:$0]  %s631, 1024, %s5, [#allocation5], 64, 64, 4
    $region41: #{tpu_custom_call.1} parent=1 // pred_fallthru
      _
    // Predicated region
    $region42: #{tpu_custom_call.1} parent=1 // pred_check
      _
    $region43: #{tpu_custom_call.1} parent=1 // pred_check_branch
      %638 = sbr.rel (0) target = $region45
    $region44: #{tpu_custom_call.1} parent=1 // pred_region
      %639 = dma.done [#allocation5], 1024
    $region45: #{tpu_custom_call.1} parent=1 // pred_fallthru
      _
    %640 = vsyncpa [#allocation4], 1
    %641 = vsyncpa [#allocation7], 1
    %642 = vsyncpa [#allocation5], 1

</llo_original>
